<compile_context>
chip_gen: v7x
topology: tpu7x:2x2x1
jax: 0.10.0
libtpu: 0.0.40
codegen_flags: <defaults>
</compile_context>

<pallas_src>
import functools

import jax
import jax.numpy as jnp
from jax.experimental import pallas as pl
from jax.experimental.pallas import tpu as pltpu

# ---- loss hyper-parameters (mirror the nnU-Net trainer defaults) -----------
AGGREGATE = "sum"          # 'sum' | 'ce' | 'dc'
IGNORE_LABEL = 255         # ce_kwargs['ignore_index'] = ignore_label (CE only)
DICE_SMOOTH = 1e-5         # soft_dice_kwargs['smooth']
# batch_dice=True, do_bg=False (standard nnU-Net SoftDiceLoss settings)


def _dc_ce_partial_kernel(x_ref, t_ref, out_ref,
                          acc_tp, acc_p, acc_oh, acc_ce, acc_vl,
                          *, num_classes, ignore_label):
    """x_ref: (C, TILE_H, W) logits; t_ref: (TILE_H, W) int32 labels.

    out_ref: (3C+2, W) per-batch partial sums
       rows [0,C)      : tp_c        = sum_px softmax_c * onehot_c
       rows [C,2C)     : sum_p_c     = sum_px softmax_c
       rows [2C,3C)    : count_c     = sum_px onehot_c
       row  3C         : ce_sum      = sum_px valid * (-log p_target)
       row  3C+1       : n_valid     = sum_px valid
    """
    C = num_classes
    h = pl.program_id(1)

    @pl.when(h == 0)
    def _init():
        acc_tp[...] = jnp.zeros_like(acc_tp)
        acc_p[...] = jnp.zeros_like(acc_p)
        acc_oh[...] = jnp.zeros_like(acc_oh)
        acc_ce[...] = jnp.zeros_like(acc_ce)
        acc_vl[...] = jnp.zeros_like(acc_vl)

    x = x_ref[...].astype(jnp.float32)          # (C, TH, W), bf16 upcast in-kernel
    t = t_ref[...]                              # (TH, W) int32

    # ---- softmax over the (leading) channel axis ---------------------------
    m = jnp.max(x, axis=0, keepdims=True)       # (1, TH, W)
    e = jnp.exp(x - m)                          # (C, TH, W)   EUP
    s = jnp.sum(e, axis=0, keepdims=True)       # (1, TH, W)
    inv = pl.reciprocal(s, approx=True)         # EUP (approx; ~2^-12 rel err)
    p = e * inv                                 # softmax probs
    log_s = jnp.log(s)                          # EUP (exact path for CE)

    # ---- one-hot of target over channels ------------------------------------
    cls = jax.lax.broadcasted_iota(jnp.int32, (C,) + t.shape, 0)   # (C, TH, W)
    onehot_b = cls == t[None, :, :]             # label==255 -> all-False (zeros)
    onehot = onehot_b.astype(jnp.float32)

    # ---- dice partials (fp/fn fused away: only tp, sum_p, counts) ----------
    acc_tp[...] += jnp.sum(jnp.where(onehot_b, p, 0.0), axis=1)    # (C, W)
    acc_p[...] += jnp.sum(p, axis=1)                               # (C, W)
    acc_oh[...] += jnp.sum(onehot, axis=1)                         # (C, W)

    # ---- cross-entropy partials (ignore_index handled via mask) ------------
    xt = jnp.sum(jnp.where(onehot_b, x, 0.0), axis=0)              # (TH, W) logit@target
    valid = (t != ignore_label).astype(jnp.float32)                # (TH, W)
    nll = valid * (m[0] + log_s[0] - xt)                           # -log p_target
    acc_ce[...] += jnp.sum(nll, axis=0, keepdims=True)             # (1, W)
    acc_vl[...] += jnp.sum(valid, axis=0, keepdims=True)           # (1, W)

    # ---- flush per-batch partials once, on the last H tile ------------------
    @pl.when(h == pl.num_programs(1) - 1)
    def _finalize():
        out_ref[0:C, :] = acc_tp[...]
        out_ref[C:2 * C, :] = acc_p[...]
        out_ref[2 * C:3 * C, :] = acc_oh[...]
        out_ref[3 * C:3 * C + 1, :] = acc_ce[...]
        out_ref[3 * C + 1:3 * C + 2, :] = acc_vl[...]


def _choose_tile_h(C, H, W, budget_bytes):
    """Largest TILE_H (multiple of 8, dividing H) whose logits block fits budget."""
    candidates = [th for th in range(8, H + 1, 8) if H % th == 0]
    if not candidates:
        return H                                  # full-H block (always legal)
    fitting = [th for th in candidates if C * th * W * 4 <= budget_bytes]
    return max(fitting) if fitting else min(candidates)


def dc_ce_partial_mergeprob_loss(net_output, target, partial_type=None, *,
                                 tile_h=None, block_bytes_budget=1 << 20):
    """net_output: (B, C, H, W) logits (f32 or bf16); target: (B, 1, H, W) int ids."""
    # partial_type accepted for signature parity but unused by the reference forward.
    B, C, H, W = net_output.shape
    if C < 2:
        raise ValueError("need C >= 2 classes (do_bg=False drops channel 0)")
    assert target.shape == (B, 1, H, W)

    if tile_h is None:
        tile_h = _choose_tile_h(C, H, W, block_bytes_budget)
    assert H % tile_h == 0 and (tile_h % 8 == 0 or tile_h == H)
    n_h = H // tile_h
    rows = 3 * C + 2

    t = target.astype(jnp.int32)

    kernel = functools.partial(_dc_ce_partial_kernel, num_classes=C,
                               ignore_label=IGNORE_LABEL)

    n_px = B * H * W
    cost = pl.CostEstimate(
        flops=12 * C * n_px,
        transcendentals=(C + 2) * n_px,
        bytes_accessed=4 * C * n_px + 4 * n_px + 4 * B * rows * W,
    )

    partials = pl.pallas_call(
        kernel,
        out_shape=jax.ShapeDtypeStruct((B, rows, W), jnp.float32),
        grid=(B, n_h),
        in_specs=[
            pl.BlockSpec((None, C, tile_h, W), lambda b, h: (b, 0, h, 0)),
            pl.BlockSpec((None, None, tile_h, W), lambda b, h: (b, 0, h, 0)),
        ],
        out_specs=pl.BlockSpec((None, rows, W), lambda b, h: (b, 0, 0)),
        scratch_shapes=[
            pltpu.VMEM((C, W), jnp.float32),   # tp
            pltpu.VMEM((C, W), jnp.float32),   # sum_p
            pltpu.VMEM((C, W), jnp.float32),   # one-hot counts
            pltpu.VMEM((1, W), jnp.float32),   # CE nll partial
            pltpu.VMEM((1, W), jnp.float32),   # CE valid-pixel count
        ],
        compiler_params=pltpu.CompilerParams(
            dimension_semantics=("parallel", "arbitrary")),
        cost_estimate=cost,
    )(net_output, t)

    # ---- tiny JAX epilogue: reduce partials and form the scalar loss -------
    sums = jnp.sum(partials, axis=(0, 2))            # (3C+2,)  batch_dice=True
    tp = sums[0:C]
    sum_p = sums[C:2 * C]
    cnt = sums[2 * C:3 * C]
    ce_sum = sums[3 * C]
    n_valid = sums[3 * C + 1]

    fp = sum_p - tp                                   # softmax rows sum to 1
    fn = cnt - tp
    nominator = 2.0 * tp + DICE_SMOOTH
    denominator = 2.0 * tp + fp + fn + DICE_SMOOTH + 1e-8
    dc = nominator / denominator
    dc_loss = -jnp.mean(dc[1:])                       # do_bg=False
    ce_loss = ce_sum / jnp.maximum(n_valid, 1.0)      # mean over non-ignored px

    if AGGREGATE == "sum":
        return ce_loss + dc_loss
    elif AGGREGATE == "ce":
        return ce_loss
    elif AGGREGATE == "dc":
        return dc_loss
    else:
        raise NotImplementedError("nah son")


def _reference_loss(net_output, target):
    """Plain-JAX reference of the same semantics (sanity check)."""
    B, C, H, W = net_output.shape
    x = net_output.astype(jnp.float32)
    t = target[:, 0].astype(jnp.int32)                        # (B, H, W)

    logp = jax.nn.log_softmax(x, axis=1)                      # (B, C, H, W)
    onehot = jax.nn.one_hot(t, C, axis=1, dtype=jnp.float32)  # 0 for out-of-range
    valid = (t != IGNORE_LABEL).astype(jnp.float32)
    ce = -jnp.sum(valid * jnp.sum(onehot * logp, axis=1)) / jnp.maximum(
        jnp.sum(valid), 1.0)

    p = jax.nn.softmax(x, axis=1)
    axes = (0, 2, 3)                                          # batch_dice=True
    tp = jnp.sum(p * onehot, axis=axes)
    fp = jnp.sum(p * (1.0 - onehot), axis=axes)
    fn = jnp.sum((1.0 - p) * onehot, axis=axes)
    dc = (2.0 * tp + DICE_SMOOTH) / (2.0 * tp + fp + fn + DICE_SMOOTH + 1e-8)
    dc_loss = -jnp.mean(dc[1:])                               # do_bg=False
    return ce + dc_loss


# TODO(synk): SoftDiceLoss in nnU-Net has no ignore handling; out-of-range labels
# (255) contribute a zero one-hot row here (same convention as the JAX reference).

if __name__ == "__main__":
    key = jax.random.PRNGKey(0)
    k1, k2, k3 = jax.random.split(key, 3)

    B, C, H, W = 2, 4, 16, 16
    net_output = jax.random.normal(k1, (B, C, H, W), dtype=jnp.float32)
    target = jax.random.randint(k2, (B, 1, H, W), 0, C, dtype=jnp.int32)

    # tolerance accounts for the approx-reciprocal softmax normalization
    TOL = dict(rtol=2e-3, atol=1e-3)

    # 1) default tiling (single H tile at this size)
    loss = jax.block_until_ready(dc_ce_partial_mergeprob_loss(net_output, target))
    ref = jax.block_until_ready(_reference_loss(net_output, target))
    assert jnp.allclose(loss, ref, **TOL), (loss, ref)

    # 2) force multi-tile accumulation along H (exercises init/finalize path)
    loss_t = jax.block_until_ready(
        dc_ce_partial_mergeprob_loss(net_output, target, tile_h=8))
    assert jnp.allclose(loss_t, ref, **TOL), (loss_t, ref)

    # 3) ignore_label=255 path for the CE term (same compiled kernel as #2)
    ign_mask = jax.random.bernoulli(k3, 0.1, (B, 1, H, W))
    target_ign = jnp.where(ign_mask, jnp.int32(IGNORE_LABEL), target)
    loss_i = jax.block_until_ready(
        dc_ce_partial_mergeprob_loss(net_output, target_ign, tile_h=8))
    ref_i = jax.block_until_ready(_reference_loss(net_output, target_ign))
    assert jnp.allclose(loss_i, ref_i, **TOL), (loss_i, ref_i)

    print("KERNEL_OK")
</pallas_src>

<mosaic_0001>
module attributes {stable_mosaic.version = 11 : i64} {
  func.func @_dc_ce_partial_kernel(%arg0: i32, %arg1: i32, %arg2: memref<1x4x16x16xf32, #tpu.memory_space<vmem>>, %arg3: memref<1x1x16x16xi32, #tpu.memory_space<vmem>>, %arg4: memref<1x14x16xf32, #tpu.memory_space<vmem>>, %arg5: memref<4x16xf32, #tpu.memory_space<vmem>>, %arg6: memref<4x16xf32, #tpu.memory_space<vmem>>, %arg7: memref<4x16xf32, #tpu.memory_space<vmem>>, %arg8: memref<1x16xf32, #tpu.memory_space<vmem>>, %arg9: memref<1x16xf32, #tpu.memory_space<vmem>>) attributes {dimension_semantics = [#tpu.dimension_semantics<parallel>, #tpu.dimension_semantics<arbitrary>], iteration_bounds = array<i64: 2, 1>, scalar_prefetch = 0 : i64, scratch_operands = 5 : i64, tpu.core_type = #tpu.core_type<tc>, window_params = [{transform_indices = @transform_0, window_bounds = array<i64: 1, 4, 16, 16>}, {transform_indices = @transform_1, window_bounds = array<i64: 1, 1, 16, 16>}, {transform_indices = @transform_2, window_bounds = array<i64: 1, 14, 16>}]} {
    %c0_i32 = arith.constant 0 : i32
    %0 = arith.cmpi eq, %arg1, %c0_i32 : i32
    %1 = arith.extui %0 : i1 to i32
    %c0_i32_0 = arith.constant 0 : i32
    %2 = arith.cmpi ne, %1, %c0_i32_0 : i32
    scf.if %2 {
      %cst_39 = arith.constant 0.000000e+00 : f32
      %63 = vector.broadcast %cst_39 : f32 to vector<4x16xf32>
      %c0_40 = arith.constant 0 : index
      %c0_41 = arith.constant 0 : index
      %64 = vector.load %arg5[%c0_40, %c0_41] : memref<4x16xf32, #tpu.memory_space<vmem>>, vector<4x16xf32>
      tpu.vector_store %arg5[%c0_40, %c0_41], %63 {strides = array<i32>} : memref<4x16xf32, #tpu.memory_space<vmem>>, vector<4x16xf32>,
      %cst_42 = arith.constant 0.000000e+00 : f32
      %65 = vector.broadcast %cst_42 : f32 to vector<4x16xf32>
      %c0_43 = arith.constant 0 : index
      %c0_44 = arith.constant 0 : index
      %66 = vector.load %arg6[%c0_43, %c0_44] : memref<4x16xf32, #tpu.memory_space<vmem>>, vector<4x16xf32>
      tpu.vector_store %arg6[%c0_43, %c0_44], %65 {strides = array<i32>} : memref<4x16xf32, #tpu.memory_space<vmem>>, vector<4x16xf32>,
      %cst_45 = arith.constant 0.000000e+00 : f32
      %67 = vector.broadcast %cst_45 : f32 to vector<4x16xf32>
      %c0_46 = arith.constant 0 : index
      %c0_47 = arith.constant 0 : index
      %68 = vector.load %arg7[%c0_46, %c0_47] : memref<4x16xf32, #tpu.memory_space<vmem>>, vector<4x16xf32>
      tpu.vector_store %arg7[%c0_46, %c0_47], %67 {strides = array<i32>} : memref<4x16xf32, #tpu.memory_space<vmem>>, vector<4x16xf32>,
      %cst_48 = arith.constant 0.000000e+00 : f32
      %69 = vector.broadcast %cst_48 : f32 to vector<1x16xf32>
      %c0_49 = arith.constant 0 : index
      %c0_50 = arith.constant 0 : index
      %70 = vector.load %arg8[%c0_49, %c0_50] : memref<1x16xf32, #tpu.memory_space<vmem>>, vector<1x16xf32>
      tpu.vector_store %arg8[%c0_49, %c0_50], %69 {strides = array<i32>} : memref<1x16xf32, #tpu.memory_space<vmem>>, vector<1x16xf32>,
      %cst_51 = arith.constant 0.000000e+00 : f32
      %71 = vector.broadcast %cst_51 : f32 to vector<1x16xf32>
      %c0_52 = arith.constant 0 : index
      %c0_53 = arith.constant 0 : index
      %72 = vector.load %arg9[%c0_52, %c0_53] : memref<1x16xf32, #tpu.memory_space<vmem>>, vector<1x16xf32>
      tpu.vector_store %arg9[%c0_52, %c0_53], %71 {strides = array<i32>} : memref<1x16xf32, #tpu.memory_space<vmem>>, vector<1x16xf32>,
    } else {
    }
    %c0 = arith.constant 0 : index
    %c0_1 = arith.constant 0 : index
    %c0_2 = arith.constant 0 : index
    %c0_3 = arith.constant 0 : index
    %3 = vector.load %arg2[%c0, %c0_1, %c0_2, %c0_3] : memref<1x4x16x16xf32, #tpu.memory_space<vmem>>, vector<1x4x16x16xf32>
    %4 = vector.shape_cast %3 : vector<1x4x16x16xf32> to vector<4x16x16xf32>
    %c0_4 = arith.constant 0 : index
    %c0_5 = arith.constant 0 : index
    %c0_6 = arith.constant 0 : index
    %c0_7 = arith.constant 0 : index
    %5 = vector.load %arg3[%c0_4, %c0_5, %c0_6, %c0_7] : memref<1x1x16x16xi32, #tpu.memory_space<vmem>>, vector<1x1x16x16xi32>
    %6 = vector.shape_cast %5 : vector<1x1x16x16xi32> to vector<16x16xi32>
    %cst = arith.constant dense<0xFF800000> : vector<16x16xf32>
    %7 = vector.multi_reduction <maximumf>, %4, %cst [0] : vector<4x16x16xf32> to vector<16x16xf32>
    %8 = vector.shape_cast %7 : vector<16x16xf32> to vector<1x16x16xf32>
    %9 = vector.broadcast %8 : vector<1x16x16xf32> to vector<4x16x16xf32>
    %10 = arith.subf %4, %9 : vector<4x16x16xf32>
    %11 = math.exp %10 : vector<4x16x16xf32>
    %cst_8 = arith.constant dense<0.000000e+00> : vector<16x16xf32>
    %12 = vector.multi_reduction <add>, %11, %cst_8 [0] : vector<4x16x16xf32> to vector<16x16xf32>
    %13 = vector.shape_cast %12 : vector<16x16xf32> to vector<1x16x16xf32>
    %14 = tpu.reciprocal %13 {approx = true} : vector<1x16x16xf32> -> vector<1x16x16xf32>
    %15 = vector.broadcast %14 : vector<1x16x16xf32> to vector<4x16x16xf32>
    %16 = arith.mulf %11, %15 : vector<4x16x16xf32>
    %17 = math.log %13 : vector<1x16x16xf32>
    %18 = tpu.iota {dimensions = array<i32: 0>} : vector<4x16x16xi32>
    %19 = vector.shape_cast %6 : vector<16x16xi32> to vector<1x16x16xi32>
    %20 = vector.broadcast %19 : vector<1x16x16xi32> to vector<4x16x16xi32>
    %21 = arith.cmpi eq, %18, %20 : vector<4x16x16xi32>
    %22 = arith.extui %21 : vector<4x16x16xi1> to vector<4x16x16xi32>
    %23 = arith.sitofp %22 : vector<4x16x16xi32> to vector<4x16x16xf32>
    %c0_9 = arith.constant 0 : index
    %c0_10 = arith.constant 0 : index
    %24 = vector.load %arg5[%c0_9, %c0_10] : memref<4x16xf32, #tpu.memory_space<vmem>>, vector<4x16xf32>
    %cst_11 = arith.constant 0.000000e+00 : f32
    %25 = vector.broadcast %cst_11 : f32 to vector<4x16x16xf32>
    %26 = arith.select %21, %16, %25 : vector<4x16x16xi1>, vector<4x16x16xf32>
    %cst_12 = arith.constant dense<0.000000e+00> : vector<4x16xf32>
    %27 = vector.multi_reduction <add>, %26, %cst_12 [1] : vector<4x16x16xf32> to vector<4x16xf32>
    %28 = arith.addf %24, %27 : vector<4x16xf32>
    %c0_13 = arith.constant 0 : index
    %c0_14 = arith.constant 0 : index
    %29 = vector.load %arg5[%c0_13, %c0_14] : memref<4x16xf32, #tpu.memory_space<vmem>>, vector<4x16xf32>
    tpu.vector_store %arg5[%c0_13, %c0_14], %28 {strides = array<i32>} : memref<4x16xf32, #tpu.memory_space<vmem>>, vector<4x16xf32>,
    %c0_15 = arith.constant 0 : index
    %c0_16 = arith.constant 0 : index
    %30 = vector.load %arg6[%c0_15, %c0_16] : memref<4x16xf32, #tpu.memory_space<vmem>>, vector<4x16xf32>
    %cst_17 = arith.constant dense<0.000000e+00> : vector<4x16xf32>
    %31 = vector.multi_reduction <add>, %16, %cst_17 [1] : vector<4x16x16xf32> to vector<4x16xf32>
    %32 = arith.addf %30, %31 : vector<4x16xf32>
    %c0_18 = arith.constant 0 : index
    %c0_19 = arith.constant 0 : index
    %33 = vector.load %arg6[%c0_18, %c0_19] : memref<4x16xf32, #tpu.memory_space<vmem>>, vector<4x16xf32>
    tpu.vector_store %arg6[%c0_18, %c0_19], %32 {strides = array<i32>} : memref<4x16xf32, #tpu.memory_space<vmem>>, vector<4x16xf32>,
    %c0_20 = arith.constant 0 : index
    %c0_21 = arith.constant 0 : index
    %34 = vector.load %arg7[%c0_20, %c0_21] : memref<4x16xf32, #tpu.memory_space<vmem>>, vector<4x16xf32>
    %cst_22 = arith.constant dense<0.000000e+00> : vector<4x16xf32>
    %35 = vector.multi_reduction <add>, %23, %cst_22 [1] : vector<4x16x16xf32> to vector<4x16xf32>
    %36 = arith.addf %34, %35 : vector<4x16xf32>
    %c0_23 = arith.constant 0 : index
    %c0_24 = arith.constant 0 : index
    %37 = vector.load %arg7[%c0_23, %c0_24] : memref<4x16xf32, #tpu.memory_space<vmem>>, vector<4x16xf32>
    tpu.vector_store %arg7[%c0_23, %c0_24], %36 {strides = array<i32>} : memref<4x16xf32, #tpu.memory_space<vmem>>, vector<4x16xf32>,
    %cst_25 = arith.constant 0.000000e+00 : f32
    %38 = vector.broadcast %cst_25 : f32 to vector<4x16x16xf32>
    %39 = arith.select %21, %4, %38 : vector<4x16x16xi1>, vector<4x16x16xf32>
    %cst_26 = arith.constant dense<0.000000e+00> : vector<16x16xf32>
    %40 = vector.multi_reduction <add>, %39, %cst_26 [0] : vector<4x16x16xf32> to vector<16x16xf32>
    %c255_i32 = arith.constant 255 : i32
    %41 = vector.broadcast %c255_i32 : i32 to vector<16x16xi32>
    %42 = arith.cmpi ne, %6, %41 : vector<16x16xi32>
    %43 = arith.extui %42 : vector<16x16xi1> to vector<16x16xi32>
    %44 = arith.sitofp %43 : vector<16x16xi32> to vector<16x16xf32>
    %45 = vector.shape_cast %8 : vector<1x16x16xf32> to vector<16x16xf32>
    %46 = vector.shape_cast %17 : vector<1x16x16xf32> to vector<16x16xf32>
    %47 = arith.addf %45, %46 : vector<16x16xf32>
    %48 = arith.subf %47, %40 : vector<16x16xf32>
    %49 = arith.mulf %44, %48 : vector<16x16xf32>
    %c0_27 = arith.constant 0 : index
    %c0_28 = arith.constant 0 : index
    %50 = vector.load %arg8[%c0_27, %c0_28] : memref<1x16xf32, #tpu.memory_space<vmem>>, vector<1x16xf32>
    %cst_29 = arith.constant dense<0.000000e+00> : vector<16xf32>
    %51 = vector.multi_reduction <add>, %49, %cst_29 [0] : vector<16x16xf32> to vector<16xf32>
    %52 = vector.shape_cast %51 : vector<16xf32> to vector<1x16xf32>
    %53 = arith.addf %50, %52 : vector<1x16xf32>
    %c0_30 = arith.constant 0 : index
    %c0_31 = arith.constant 0 : index
    %54 = vector.load %arg8[%c0_30, %c0_31] : memref<1x16xf32, #tpu.memory_space<vmem>>, vector<1x16xf32>
    tpu.vector_store %arg8[%c0_30, %c0_31], %53 {strides = array<i32>} : memref<1x16xf32, #tpu.memory_space<vmem>>, vector<1x16xf32>,
    %c0_32 = arith.constant 0 : index
    %c0_33 = arith.constant 0 : index
    %55 = vector.load %arg9[%c0_32, %c0_33] : memref<1x16xf32, #tpu.memory_space<vmem>>, vector<1x16xf32>
    %cst_34 = arith.constant dense<0.000000e+00> : vector<16xf32>
    %56 = vector.multi_reduction <add>, %44, %cst_34 [0] : vector<16x16xf32> to vector<16xf32>
    %57 = vector.shape_cast %56 : vector<16xf32> to vector<1x16xf32>
    %58 = arith.addf %55, %57 : vector<1x16xf32>
    %c0_35 = arith.constant 0 : index
    %c0_36 = arith.constant 0 : index
    %59 = vector.load %arg9[%c0_35, %c0_36] : memref<1x16xf32, #tpu.memory_space<vmem>>, vector<1x16xf32>
    tpu.vector_store %arg9[%c0_35, %c0_36], %58 {strides = array<i32>} : memref<1x16xf32, #tpu.memory_space<vmem>>, vector<1x16xf32>,
    %c0_i32_37 = arith.constant 0 : i32
    %60 = arith.cmpi eq, %arg1, %c0_i32_37 : i32
    %61 = arith.extui %60 : i1 to i32
    %c0_i32_38 = arith.constant 0 : i32
    %62 = arith.cmpi ne, %61, %c0_i32_38 : i32
    scf.if %62 {
      %c0_39 = arith.constant 0 : index
      %c0_40 = arith.constant 0 : index
      %63 = vector.load %arg5[%c0_39, %c0_40] : memref<4x16xf32, #tpu.memory_space<vmem>>, vector<4x16xf32>
      %c0_41 = arith.constant 0 : index
      %c0_42 = arith.constant 0 : index
      %c0_43 = arith.constant 0 : index
      %64 = vector.load %arg4[%c0_41, %c0_42, %c0_43] : memref<1x14x16xf32, #tpu.memory_space<vmem>>, vector<1x4x16xf32>
      %65 = vector.shape_cast %64 : vector<1x4x16xf32> to vector<4x16xf32>
      %66 = vector.shape_cast %63 : vector<4x16xf32> to vector<1x4x16xf32>
      tpu.vector_store %arg4[%c0_41, %c0_42, %c0_43], %66 {strides = array<i32>} : memref<1x14x16xf32, #tpu.memory_space<vmem>>, vector<1x4x16xf32>,
      %c0_44 = arith.constant 0 : index
      %c0_45 = arith.constant 0 : index
      %67 = vector.load %arg6[%c0_44, %c0_45] : memref<4x16xf32, #tpu.memory_space<vmem>>, vector<4x16xf32>
      %c0_46 = arith.constant 0 : index
      %c4 = arith.constant 4 : index
      %c0_47 = arith.constant 0 : index
      %68 = vector.load %arg4[%c0_46, %c4, %c0_47] : memref<1x14x16xf32, #tpu.memory_space<vmem>>, vector<1x4x16xf32>
      %69 = vector.shape_cast %68 : vector<1x4x16xf32> to vector<4x16xf32>
      %70 = vector.shape_cast %67 : vector<4x16xf32> to vector<1x4x16xf32>
      tpu.vector_store %arg4[%c0_46, %c4, %c0_47], %70 {strides = array<i32>} : memref<1x14x16xf32, #tpu.memory_space<vmem>>, vector<1x4x16xf32>,
      %c0_48 = arith.constant 0 : index
      %c0_49 = arith.constant 0 : index
      %71 = vector.load %arg7[%c0_48, %c0_49] : memref<4x16xf32, #tpu.memory_space<vmem>>, vector<4x16xf32>
      %c0_50 = arith.constant 0 : index
      %c8 = arith.constant 8 : index
      %c0_51 = arith.constant 0 : index
      %72 = vector.load %arg4[%c0_50, %c8, %c0_51] : memref<1x14x16xf32, #tpu.memory_space<vmem>>, vector<1x4x16xf32>
      %73 = vector.shape_cast %72 : vector<1x4x16xf32> to vector<4x16xf32>
      %74 = vector.shape_cast %71 : vector<4x16xf32> to vector<1x4x16xf32>
      tpu.vector_store %arg4[%c0_50, %c8, %c0_51], %74 {strides = array<i32>} : memref<1x14x16xf32, #tpu.memory_space<vmem>>, vector<1x4x16xf32>,
      %c0_52 = arith.constant 0 : index
      %c0_53 = arith.constant 0 : index
      %75 = vector.load %arg8[%c0_52, %c0_53] : memref<1x16xf32, #tpu.memory_space<vmem>>, vector<1x16xf32>
      %c0_54 = arith.constant 0 : index
      %c12 = arith.constant 12 : index
      %c0_55 = arith.constant 0 : index
      %76 = vector.load %arg4[%c0_54, %c12, %c0_55] : memref<1x14x16xf32, #tpu.memory_space<vmem>>, vector<1x1x16xf32>
      %77 = vector.shape_cast %76 : vector<1x1x16xf32> to vector<1x16xf32>
      %78 = vector.shape_cast %75 : vector<1x16xf32> to vector<1x1x16xf32>
      tpu.vector_store %arg4[%c0_54, %c12, %c0_55], %78 {strides = array<i32>} : memref<1x14x16xf32, #tpu.memory_space<vmem>>, vector<1x1x16xf32>,
      %c0_56 = arith.constant 0 : index
      %c0_57 = arith.constant 0 : index
      %79 = vector.load %arg9[%c0_56, %c0_57] : memref<1x16xf32, #tpu.memory_space<vmem>>, vector<1x16xf32>
      %c0_58 = arith.constant 0 : index
      %c13 = arith.constant 13 : index
      %c0_59 = arith.constant 0 : index
      %80 = vector.load %arg4[%c0_58, %c13, %c0_59] : memref<1x14x16xf32, #tpu.memory_space<vmem>>, vector<1x1x16xf32>
      %81 = vector.shape_cast %80 : vector<1x1x16xf32> to vector<1x16xf32>
      %82 = vector.shape_cast %79 : vector<1x16xf32> to vector<1x1x16xf32>
      tpu.vector_store %arg4[%c0_58, %c13, %c0_59], %82 {strides = array<i32>} : memref<1x14x16xf32, #tpu.memory_space<vmem>>, vector<1x1x16xf32>,
    } else {
    }
    return
  }
  func.func @transform_0(%arg0: i32, %arg1: i32) -> (i32, i32, i32, i32) {
    %c0_i32 = arith.constant 0 : i32
    %c0_i32_0 = arith.constant 0 : i32
    %c0_i32_1 = arith.constant 0 : i32
    return %arg0, %c0_i32, %arg1, %c0_i32_0 : i32, i32, i32, i32
  }
  func.func @transform_1(%arg0: i32, %arg1: i32) -> (i32, i32, i32, i32) {
    %c0_i32 = arith.constant 0 : i32
    %c0_i32_0 = arith.constant 0 : i32
    %c0_i32_1 = arith.constant 0 : i32
    return %arg0, %c0_i32, %arg1, %c0_i32_0 : i32, i32, i32, i32
  }
  func.func @transform_2(%arg0: i32, %arg1: i32) -> (i32, i32, i32) {
    %c0_i32 = arith.constant 0 : i32
    %c0_i32_0 = arith.constant 0 : i32
    %c0_i32_1 = arith.constant 0 : i32
    return %arg0, %c0_i32, %c0_i32_0 : i32, i32, i32
  }
}

</mosaic_0001>

<llo_original>
// kernel: tpu_custom_call.1
$region0: #{tpu_custom_call.1}
  #allocation0 [shape = 'u32[]', space=smem, size = 0x4, offset = 0x4, fixed_abs, tag = 'smem constant byte address 0x4 - core index']
  #allocation1 [shape = 'u32[144,128]{1,0:T(1,128)}', space=vmem, size = 0x12000, scoped, tag = 'internal scratch']
  #allocation2 [shape = 'f32[4,16]{1,0:T(4,128)}', space=vmem, size = 0x800, scoped, tag = 'scratch operand']
  #allocation3 [shape = 'f32[4,16]{1,0:T(4,128)}', space=vmem, size = 0x800, scoped, tag = 'scratch operand']
  #allocation4 [shape = 'f32[4,16]{1,0:T(4,128)}', space=vmem, size = 0x800, scoped, tag = 'scratch operand']
  #allocation5 [shape = 'f32[1,16]{1,0:T(1,128)}', space=vmem, size = 0x200, scoped, tag = 'scratch operand']
  #allocation6 [shape = 'f32[1,16]{1,0:T(1,128)}', space=vmem, size = 0x200, scoped, tag = 'scratch operand']
  %s0 = inlined_call_operand.hbm [shape: f32[2,4,16,16], index: 0, kind: input, shape index: {}]
  %s1 = inlined_call_operand.hbm [shape: s32[2,1,16,16], index: 1, kind: input, shape index: {}]
  %s2 = inlined_call_operand.vmem [shape: f32[2,14,16], index: 2, kind: output, shape index: {}]
  %s3 = sld [smem:[#allocation0]]
  $region57: #{tpu_custom_call.1} parent=0
    _
  %s5 = ssub.s32 1, %s3
  %s6 = scalar_select 0, %s5, %s3
  $region1: #{tpu_custom_call.1} parent=0
    #allocation7 [shape = 'u8[65536]{0}', space=vmem, size = 0x10000, scoped, tag = 'input window, operand 0']
    #allocation8 [shape = 's32[2]{0}', space=sflag, size = 0x8, scoped, tag = 'scoped memory for tpu_custom_call.1']
    #allocation9 [shape = 'u8[16384]{0}', space=vmem, size = 0x4000, scoped, tag = 'input window, operand 1']
    #allocation10 [shape = 's32[2]{0}', space=sflag, size = 0x8, scoped, tag = 'scoped memory for tpu_custom_call.1']
    %7 = vsyncpa [#allocation8], 0
    %s8 = scalar_lea.sflag [#allocation8], 1
    %9 = vsyncpa %s8, 0
    %10 = vsyncpa [#allocation10], 0
    %s11 = scalar_lea.sflag [#allocation10], 1
    %12 = vsyncpa %s11, 0
    loop: start=0, step=1, limit=4
    $region2: #{tpu_custom_call.1} parent=1 // loop_pre_header
      _
    $region3: #{tpu_custom_call.1} parent=1 // loop_header
      %s14 = sphi 0, %s18
      %p15 = scmp.ge.s32.totalorder %s14, 4
      %s21 = sphi 0, %s33
      %s22 = sphi 0, %s29
      %s23 = sphi 0, %s21
      %s24 = sphi 0, %s22
      %s25 = sphi 0, %s23
      %s26 = sphi 0, %s24
      %s38 = sphi 0, %s40
      %s41 = sphi 0, %s38
      %s42 = sphi 0, %s41
      %s58 = sphi 0, %s42
      %s66 = sphi 0, %s68
      %s69 = sphi 0, %s66
      %s70 = sphi 0, %s69
      %s86 = sphi 0, %s70
      %s92 = sphi 0, %s94
      %s95 = sphi 0, %s92
      %s96 = sphi 0, %s95
      %s112 = sphi 0, %s96
    $region4: #{tpu_custom_call.1} parent=1 // loop_header_branch
      %17 = sbr.rel (%p15) target = $region8
    $region5: #{tpu_custom_call.1} parent=1 // loop_body
      %s19 = ssub.s32 %s14, 1
      %s20 = ssub.s32 %s14, 2
      %s27 = sadd.s32 1, %s22
      %p28 = scmp.ge.s32.totalorder %s27, 1
      %s29 = scalar_select %p28, 0, %s27
      %s30 = sadd.s32 1, %s21
      %s31 = scalar_select %p28, %s30, %s21
      %p32 = scmp.ge.s32.totalorder %s31, 2
      %s33 = scalar_select %p32, 0, %s31
      %s34 = ssub.s32 %s21, %s33
      %s35 = ssub.s32 %s22, %s29
      %s36 = sor.u32 %s34, %s35
      %p37 = scmp.eq.s32.totalorder %s36, 0
      %s39 = sadd.s32 %s38, 1
      %s40 = scalar_select %p37, %s38, %s39
      %p43 = pneg %p37
      %p44 = scmp.eq.s32.totalorder %s14, 1
      %p45 = por %p43, %p44
      %p46 = scmp.ne.s32.totalorder %s38, %s41
      %p47 = scmp.eq.s32.totalorder %s14, 0
      %p48 = por %p46, %p47
      %p49 = scmp.ne.s32.totalorder %s38, %s41
      %p50 = scmp.eq.s32.totalorder %s19, 1
      %p51 = por %p49, %p50
      %p52 = scmp.ne.s32.totalorder %s41, %s42
      %p53 = scmp.eq.s32.totalorder %s19, 0
      %p54 = por %p52, %p53
      %p55 = scmp.ne.s32.totalorder %s41, %s42
      %p56 = scmp.eq.s32.totalorder %s20, 1
      %p57 = por %p55, %p56
      %p59 = scmp.ne.s32.totalorder %s42, %s58
      %p60 = scmp.eq.s32.totalorder %s20, 0
      %p61 = por %p59, %p60
      %s62 = ssub.s32 %s21, %s33
      %s63 = ssub.s32 %s22, %s29
      %s64 = sor.u32 %s62, %s63
      %p65 = scmp.eq.s32.totalorder %s64, 0
      %s67 = sadd.s32 %s66, 1
      %s68 = scalar_select %p65, %s66, %s67
      %p71 = pneg %p65
      %p72 = scmp.eq.s32.totalorder %s14, 1
      %p73 = por %p71, %p72
      %p74 = scmp.ne.s32.totalorder %s66, %s69
      %p75 = scmp.eq.s32.totalorder %s14, 0
      %p76 = por %p74, %p75
      %p77 = scmp.ne.s32.totalorder %s66, %s69
      %p78 = scmp.eq.s32.totalorder %s19, 1
      %p79 = por %p77, %p78
      %p80 = scmp.ne.s32.totalorder %s69, %s70
      %p81 = scmp.eq.s32.totalorder %s19, 0
      %p82 = por %p80, %p81
      %p83 = scmp.ne.s32.totalorder %s69, %s70
      %p84 = scmp.eq.s32.totalorder %s20, 1
      %p85 = por %p83, %p84
      %p87 = scmp.ne.s32.totalorder %s70, %s86
      %p88 = scmp.eq.s32.totalorder %s20, 0
      %p89 = por %p87, %p88
      %s90 = ssub.s32 %s21, %s33
      %p91 = scmp.eq.s32.totalorder %s90, 0
      %s93 = sadd.s32 %s92, 1
      %s94 = scalar_select %p91, %s92, %s93
      %p97 = pneg %p91
      %p98 = scmp.eq.s32.totalorder %s14, 1
      %p99 = por %p97, %p98
      %p100 = scmp.ne.s32.totalorder %s92, %s95
      %p101 = scmp.eq.s32.totalorder %s14, 0
      %p102 = por %p100, %p101
      %p103 = scmp.ne.s32.totalorder %s92, %s95
      %p104 = scmp.eq.s32.totalorder %s19, 1
      %p105 = por %p103, %p104
      %p106 = scmp.ne.s32.totalorder %s95, %s96
      %p107 = scmp.eq.s32.totalorder %s19, 0
      %p108 = por %p106, %p107
      %p109 = scmp.ne.s32.totalorder %s95, %s96
      %p110 = scmp.eq.s32.totalorder %s20, 1
      %p111 = por %p109, %p110
      %p113 = scmp.ne.s32.totalorder %s96, %s112
      %p114 = scmp.eq.s32.totalorder %s20, 0
      %p115 = por %p113, %p114
      %p116 = scmp.le.s32.totalorder 1, %s14
      %p117 = scmp.lt.s32.totalorder %s14, 3
      %p118 = pnand %p116, %p117
      %p119 = pneg %p118
      // Predicated region
      $region9: #{tpu_custom_call.1} parent=5 // pred_check
        _
      $region10: #{tpu_custom_call.1} parent=5 // pred_check_branch
        %121 = sbr.rel (%p118) target = $region12
      $region11: #{tpu_custom_call.1} parent=5 // pred_region
        %s122 = ssub.s32 %s14, 1
      $region12: #{tpu_custom_call.1} parent=5 // pred_fallthru
        _
      %p123 = scmp.lt.s32.totalorder %s14, 2
      // Predicated region
      $region13: #{tpu_custom_call.1} parent=5 // pred_check
        %p124 = pneg %p123
      $region14: #{tpu_custom_call.1} parent=5 // pred_check_branch
        %126 = sbr.rel (%p124) target = $region16
      $region15: #{tpu_custom_call.1} parent=5 // pred_region
        // Predicated region
        $region17: #{tpu_custom_call.1} parent=15 // pred_check
          %p127 = pneg %p48
        $region18: #{tpu_custom_call.1} parent=15 // pred_check_branch
          %129 = sbr.rel (%p127) target = $region20
        $region19: #{tpu_custom_call.1} parent=15 // pred_region
          %s130 = sand.u32 %s38, 1
          %s131 = scalar_lea.sflag [#allocation8], %s130
          %s132 = sand.u32 %s38, 1
          %s133 = smul.addr %s132, 64
          %s134 = scalar_lea.vmem [#allocation7], %s133
          %s135 = smul.u32 2, %s22
          %s137 = ssub.s32 1024, 1024
          %138 = vsyncadd %s131, %s137
          %s139 = smul.addr %s21, 8
          %s140 = sadd.s32 %s135, %s139
          %s141 = smul.addr %s140, 128
          %s142 = scalar_lea.hbm %s0, %s141
          %s143 = sshll.u32 %s134, 4
          %s144 = int_to_ptr.vmem [resolvable:$true] %s143
          %149 = dma.hbm_to_vmem [thread:$0]  %s142, 1024, %s144, %s131, 128, 128, 8
        $region20: #{tpu_custom_call.1} parent=15 // pred_fallthru
          _
        // Predicated region
        $region21: #{tpu_custom_call.1} parent=15 // pred_check
          %p150 = pneg %p76
        $region22: #{tpu_custom_call.1} parent=15 // pred_check_branch
          %152 = sbr.rel (%p150) target = $region24
        $region23: #{tpu_custom_call.1} parent=15 // pred_region
          %s153 = sand.u32 %s66, 1
          %s154 = scalar_lea.sflag [#allocation10], %s153
          %s155 = sand.u32 %s66, 1
          %s156 = smul.addr %s155, 16
          %s157 = scalar_lea.vmem [#allocation9], %s156
          %s158 = smul.u32 2, %s22
          %s160 = ssub.s32 256, 256
          %161 = vsyncadd %s154, %s160
          %s162 = smul.addr %s21, 2
          %s163 = sadd.s32 %s158, %s162
          %s164 = smul.addr %s163, 128
          %s165 = scalar_lea.hbm %s1, %s164
          %s166 = sshll.u32 %s157, 4
          %s167 = int_to_ptr.vmem [resolvable:$true] %s166
          %172 = dma.hbm_to_vmem [thread:$0]  %s165, 256, %s167, %s154, 128, 128, 8
        $region24: #{tpu_custom_call.1} parent=15 // pred_fallthru
          _
      $region16: #{tpu_custom_call.1} parent=5 // pred_fallthru
        _
      %p173 = scmp.le.s32.totalorder 1, %s14
      %p174 = scmp.lt.s32.totalorder %s14, 3
      %p175 = pnand %p173, %p174
      %p176 = pneg %p175
      // Predicated region
      $region25: #{tpu_custom_call.1} parent=5 // pred_check
        _
      $region26: #{tpu_custom_call.1} parent=5 // pred_check_branch
        %178 = sbr.rel (%p175) target = $region28
      $region27: #{tpu_custom_call.1} parent=5 // pred_region
        %s179 = ssub.s32 %s14, 1
        %s180 = sand.u32 %s41, 1
        %s181 = scalar_lea.sflag [#allocation8], %s180
        %s182 = sand.u32 %s41, 1
        %s183 = smul.addr %s182, 64
        %s184 = scalar_lea.vmem [#allocation7], %s183
        // Predicated region
        $region29: #{tpu_custom_call.1} parent=27 // pred_check
          %p185 = pneg %p54
        $region30: #{tpu_custom_call.1} parent=27 // pred_check_branch
          %187 = sbr.rel (%p185) target = $region32
        $region31: #{tpu_custom_call.1} parent=27 // pred_region
          %188 = dma.done %s181, 1024
        $region32: #{tpu_custom_call.1} parent=27 // pred_fallthru
          _
        %s189 = sand.u32 %s69, 1
        %s190 = scalar_lea.sflag [#allocation10], %s189
        %s191 = sand.u32 %s69, 1
        %s192 = smul.addr %s191, 16
        %s193 = scalar_lea.vmem [#allocation9], %s192
        // Predicated region
        $region33: #{tpu_custom_call.1} parent=27 // pred_check
          %p194 = pneg %p82
        $region34: #{tpu_custom_call.1} parent=27 // pred_check_branch
          %196 = sbr.rel (%p194) target = $region36
        $region35: #{tpu_custom_call.1} parent=27 // pred_region
          %197 = dma.done %s190, 256
        $region36: #{tpu_custom_call.1} parent=27 // pred_fallthru
          _
        %s198 = sand.u32 %s41, 1
        %s199 = scalar_lea.sflag [#allocation8], %s198
        %s200 = sand.u32 %s41, 1
        %s201 = smul.addr %s200, 64
        %s202 = scalar_lea.vmem [#allocation7], %s201
        %p203 = pneg %p54
        %p204 = pneg %p51
        %s205 = sand.u32 %s69, 1
        %s206 = scalar_lea.sflag [#allocation10], %s205
        %s207 = sand.u32 %s69, 1
        %s208 = smul.addr %s207, 16
        %s209 = scalar_lea.vmem [#allocation9], %s208
        %p210 = pneg %p82
        %p211 = pneg %p79
        %p212 = pneg %p108
        %p213 = pneg %p105
        %p214 = scmp.lt.s32.totalorder %s23, 1
        %s215 = scalar_select %p214, %s23, 1
        %s216 = smul.addr %s215, 2
        %s217 = smul.addr %s216, 8
        %s218 = scalar_lea.vmem %s2, %s217
        %s219 = smul.u32 2, %s24
        %s220 = smul.u32 2, %s24
        %p221 = scmp.lt.s32.totalorder %s23, 1
        %s222 = scalar_select %p221, %s23, 1
        %s223 = smul.addr %s222, 2
        %s224 = smul.addr %s223, 8
        %s225 = scalar_lea.vmem %s2, %s224
        %p226 = scmp.eq.s32.totalorder %s24, 0
        // Predicated region
        $region37: #{tpu_custom_call.1} parent=27 // pred_check
          %p227 = pneg %p226
        $region38: #{tpu_custom_call.1} parent=27 // pred_check_branch
          %229 = sbr.rel (%p227) target = $region40
        $region39: #{tpu_custom_call.1} parent=27 // pred_region
          %vm230 = vcmask 125952
          %231 = vst.msk [vmem:[#allocation2] sm:$0xf] %vm230, 0.0
          %232 = vst.msk [vmem:[#allocation3] sm:$0xf] %vm230, 0.0
          %233 = vst.msk [vmem:[#allocation4] sm:$0xf] %vm230, 0.0
          %vm234 = vcmask 122880
          %235 = vst.msk [vmem:[#allocation5] sm:$0x1] %vm234, 0.0
          %236 = vst.msk [vmem:[#allocation6] sm:$0x1] %vm234, 0.0
        $region40: #{tpu_custom_call.1} parent=27 // pred_fallthru
          _
        %v237 = vld [vmem:[%s184] sm:$0xff]
        %v238 = vld [vmem:[%s184 + $0x8] sm:$0xff]
        %v239 = vld [vmem:[%s184 + $0x10] sm:$0xff]
        %v240 = vld [vmem:[%s184 + $0x18] sm:$0xff]
        %v241 = vld [vmem:[%s184 + $0x20] sm:$0xff]
        %v242 = vld [vmem:[%s184 + $0x28] sm:$0xff]
        %v243 = vld [vmem:[%s184 + $0x30] sm:$0xff]
        %v244 = vld [vmem:[%s184 + $0x38] sm:$0xff]
        %v245 = vld [vmem:[%s193] sm:$0xff]
        %v246 = vld [vmem:[%s193 + $0x8] sm:$0xff]
        %vm247 = vcmask 130048
        %v248 = vsel %vm247, %v237, -inf
        %v249 = vsel %vm247, %v239, -inf
        %v250 = vsel %vm247, %v241, -inf
        %v251 = vmax.f32 %v248, %v250
        %v252 = vsel %vm247, %v243, -inf
        %v253 = vmax.f32 %v249, %v252
        %v254 = vmax.f32 %v251, %v253
        %v255 = vsel %vm247, %v238, -inf
        %v256 = vsel %vm247, %v240, -inf
        %v257 = vsel %vm247, %v242, -inf
        %v258 = vmax.f32 %v255, %v257
        %v259 = vsel %vm247, %v244, -inf
        %v260 = vmax.f32 %v256, %v259
        %v261 = vmax.f32 %v258, %v260
        %v262 = vsub.f32 %v237, %v254
        %v263 = vsub.f32 %v238, %v261
        %v264 = vsub.f32 %v239, %v254
        %v265 = vsub.f32 %v240, %v261
        %v266 = vsub.f32 %v241, %v254
        %v267 = vsub.f32 %v242, %v261
        %v268 = vsub.f32 %v243, %v254
        %v269 = vsub.f32 %v244, %v261
        %v270 = vmul.f32 %v262, 1.442695
        %v271 = vpow.pop %v270
        %v272 = vmul.f32 %v263, 1.442695
        %v273 = vpow.pop %v272
        %v274 = vmul.f32 %v264, 1.442695
        %v275 = vpow.pop %v274
        %v276 = vmul.f32 %v265, 1.442695
        %v277 = vpow.pop %v276
        %v278 = vmul.f32 %v266, 1.442695
        %v279 = vpow.pop %v278
        %v280 = vmul.f32 %v267, 1.442695
        %v281 = vpow.pop %v280
        %v282 = vmul.f32 %v268, 1.442695
        %v283 = vpow.pop %v282
        %v284 = vmul.f32 %v269, 1.442695
        %v285 = vpow.pop %v284
        %v286 = vsel %vm247, %v271, 0.0
        %v287 = vsel %vm247, %v275, 0.0
        %v288 = vadd.f32 %v286, %v287
        %v289 = vsel %vm247, %v279, 0.0
        %v290 = vadd.f32 %v288, %v289
        %v291 = vsel %vm247, %v283, 0.0
        %v292 = vadd.f32 %v290, %v291
        %v293 = vsel %vm247, %v273, 0.0
        %v294 = vsel %vm247, %v277, 0.0
        %v295 = vadd.f32 %v293, %v294
        %v296 = vsel %vm247, %v281, 0.0
        %v297 = vadd.f32 %v295, %v296
        %v298 = vsel %vm247, %v285, 0.0
        %v299 = vadd.f32 %v297, %v298
        %v300 = vrcp.pop %v292
        %v301 = vrcp.pop %v299
        %v302 = vmul.f32 %v271, %v300
        %v303 = vmul.f32 %v273, %v301
        %v304 = vmul.f32 %v275, %v300
        %v305 = vmul.f32 %v277, %v301
        %v306 = vmul.f32 %v279, %v300
        %v307 = vmul.f32 %v281, %v301
        %v308 = vmul.f32 %v283, %v300
        %v309 = vmul.f32 %v285, %v301
        %v310 = vlog2.pop %v292
        %v311 = vmul.f32 %v310, 0.6931472
        %v312 = vlog2.pop %v299
        %v313 = vmul.f32 %v312, 0.6931472
        %vm314 = vcmp.eq.s32.totalorder %v245, 0
        %vm315 = vcmp.eq.s32.totalorder %v246, 0
        %vm316 = vcmp.eq.s32.totalorder %v245, 1
        %vm317 = vcmp.eq.s32.totalorder %v246, 1
        %vm318 = vcmp.eq.s32.totalorder %v245, 2
        %vm319 = vcmp.eq.s32.totalorder %v246, 2
        %vm320 = vcmp.eq.s32.totalorder %v245, 3
        %vm321 = vcmp.eq.s32.totalorder %v246, 3
        %v322 = vsel %vm314, 1, 0
        %v323 = vsel %vm315, 1, 0
        %v324 = vsel %vm316, 1, 0
        %v325 = vsel %vm317, 1, 0
        %v326 = vsel %vm318, 1, 0
        %v327 = vsel %vm319, 1, 0
        %v328 = vsel %vm320, 1, 0
        %v329 = vsel %vm321, 1, 0
        %v330 = vcvt.s32.f32 %v322
        %v331 = vcvt.s32.f32 %v323
        %v332 = vcvt.s32.f32 %v324
        %v333 = vcvt.s32.f32 %v325
        %v334 = vcvt.s32.f32 %v326
        %v335 = vcvt.s32.f32 %v327
        %v336 = vcvt.s32.f32 %v328
        %v337 = vcvt.s32.f32 %v329
        %v338 = vld [vmem:[#allocation2] sm:$0xf]
        %v339 = vsel %vm314, %v302, 0.0
        %v340 = vsel %vm315, %v303, 0.0
        %v341 = vsel %vm316, %v304, 0.0
        %v342 = vsel %vm317, %v305, 0.0
        %v343 = vsel %vm318, %v306, 0.0
        %v344 = vsel %vm319, %v307, 0.0
        %v345 = vsel %vm320, %v308, 0.0
        %v346 = vsel %vm321, %v309, 0.0
        %v347 = vsel %vm247, %v339, 0.0
        %v348 = vsel %vm247, %v340, 0.0
        %v349 = vadd.f32 %v347, %v348
        %v350 = vrot.slane %v349, 4
        %v351 = vadd.f32 %v349, %v350
        %v352 = vrot.slane %v351, 2
        %v353 = vadd.f32 %v351, %v352
        %v354 = vrot.slane %v353, 1
        %v355 = vadd.f32 %v353, %v354
        %v356 = vsel %vm247, %v341, 0.0
        %v357 = vsel %vm247, %v342, 0.0
        %v358 = vadd.f32 %v356, %v357
        %v359 = vrot.slane %v358, 4
        %v360 = vadd.f32 %v358, %v359
        %v361 = vrot.slane %v360, 2
        %v362 = vadd.f32 %v360, %v361
        %v363 = vrot.slane %v362, 1
        %v364 = vadd.f32 %v362, %v363
        %v365 = vsel %vm247, %v343, 0.0
        %v366 = vsel %vm247, %v344, 0.0
        %v367 = vadd.f32 %v365, %v366
        %v368 = vrot.slane %v367, 4
        %v369 = vadd.f32 %v367, %v368
        %v370 = vrot.slane %v369, 2
        %v371 = vadd.f32 %v369, %v370
        %v372 = vrot.slane %v371, 1
        %v373 = vadd.f32 %v371, %v372
        %v374 = vsel %vm247, %v345, 0.0
        %v375 = vsel %vm247, %v346, 0.0
        %v376 = vadd.f32 %v374, %v375
        %v377 = vrot.slane %v376, 4
        %v378 = vadd.f32 %v376, %v377
        %v379 = vrot.slane %v378, 2
        %v380 = vadd.f32 %v378, %v379
        %v381 = vrot.slane %v380, 1
        %v382 = vadd.f32 %v380, %v381
        %vm387 = vcmask 1041409
        %v388 = vsel %vm387, %v364, %v355
        %vm389 = vcmask 1042434
        %v390 = vsel %vm389, %v373, %v388
        %vm391 = vcmask 1043459
        %v392 = vsel %vm391, %v382, %v390
        %v394 = vadd.f32 %v338, %v392
        %vm395 = vcmask 125952
        %396 = vst.msk [vmem:[#allocation2] sm:$0xf] %vm395, %v394
        %v397 = vld [vmem:[#allocation3] sm:$0xf]
        %v398 = vsel %vm247, %v302, 0.0
        %v399 = vsel %vm247, %v303, 0.0
        %v400 = vadd.f32 %v398, %v399
        %v401 = vrot.slane %v400, 4
        %v402 = vadd.f32 %v400, %v401
        %v403 = vrot.slane %v402, 2
        %v404 = vadd.f32 %v402, %v403
        %v405 = vrot.slane %v404, 1
        %v406 = vadd.f32 %v404, %v405
        %v407 = vsel %vm247, %v304, 0.0
        %v408 = vsel %vm247, %v305, 0.0
        %v409 = vadd.f32 %v407, %v408
        %v410 = vrot.slane %v409, 4
        %v411 = vadd.f32 %v409, %v410
        %v412 = vrot.slane %v411, 2
        %v413 = vadd.f32 %v411, %v412
        %v414 = vrot.slane %v413, 1
        %v415 = vadd.f32 %v413, %v414
        %v416 = vsel %vm247, %v306, 0.0
        %v417 = vsel %vm247, %v307, 0.0
        %v418 = vadd.f32 %v416, %v417
        %v419 = vrot.slane %v418, 4
        %v420 = vadd.f32 %v418, %v419
        %v421 = vrot.slane %v420, 2
        %v422 = vadd.f32 %v420, %v421
        %v423 = vrot.slane %v422, 1
        %v424 = vadd.f32 %v422, %v423
        %v425 = vsel %vm247, %v308, 0.0
        %v426 = vsel %vm247, %v309, 0.0
        %v427 = vadd.f32 %v425, %v426
        %v428 = vrot.slane %v427, 4
        %v429 = vadd.f32 %v427, %v428
        %v430 = vrot.slane %v429, 2
        %v431 = vadd.f32 %v429, %v430
        %v432 = vrot.slane %v431, 1
        %v433 = vadd.f32 %v431, %v432
        %v438 = vsel %vm387, %v415, %v406
        %v439 = vsel %vm389, %v424, %v438
        %v440 = vsel %vm391, %v433, %v439
        %v442 = vadd.f32 %v397, %v440
        %443 = vst.msk [vmem:[#allocation3] sm:$0xf] %vm395, %v442
        %v444 = vld [vmem:[#allocation4] sm:$0xf]
        %v445 = vsel %vm247, %v330, 0.0
        %v446 = vsel %vm247, %v331, 0.0
        %v447 = vadd.f32 %v445, %v446
        %v448 = vrot.slane %v447, 4
        %v449 = vadd.f32 %v447, %v448
        %v450 = vrot.slane %v449, 2
        %v451 = vadd.f32 %v449, %v450
        %v452 = vrot.slane %v451, 1
        %v453 = vadd.f32 %v451, %v452
        %v454 = vsel %vm247, %v332, 0.0
        %v455 = vsel %vm247, %v333, 0.0
        %v456 = vadd.f32 %v454, %v455
        %v457 = vrot.slane %v456, 4
        %v458 = vadd.f32 %v456, %v457
        %v459 = vrot.slane %v458, 2
        %v460 = vadd.f32 %v458, %v459
        %v461 = vrot.slane %v460, 1
        %v462 = vadd.f32 %v460, %v461
        %v463 = vsel %vm247, %v334, 0.0
        %v464 = vsel %vm247, %v335, 0.0
        %v465 = vadd.f32 %v463, %v464
        %v466 = vrot.slane %v465, 4
        %v467 = vadd.f32 %v465, %v466
        %v468 = vrot.slane %v467, 2
        %v469 = vadd.f32 %v467, %v468
        %v470 = vrot.slane %v469, 1
        %v471 = vadd.f32 %v469, %v470
        %v472 = vsel %vm247, %v336, 0.0
        %v473 = vsel %vm247, %v337, 0.0
        %v474 = vadd.f32 %v472, %v473
        %v475 = vrot.slane %v474, 4
        %v476 = vadd.f32 %v474, %v475
        %v477 = vrot.slane %v476, 2
        %v478 = vadd.f32 %v476, %v477
        %v479 = vrot.slane %v478, 1
        %v480 = vadd.f32 %v478, %v479
        %v485 = vsel %vm387, %v462, %v453
        %v486 = vsel %vm389, %v471, %v485
        %v487 = vsel %vm391, %v480, %v486
        %v489 = vadd.f32 %v444, %v487
        %490 = vst.msk [vmem:[#allocation4] sm:$0xf] %vm395, %v489
        %v491 = vsel %vm314, %v237, 0.0
        %v492 = vsel %vm315, %v238, 0.0
        %v493 = vsel %vm316, %v239, 0.0
        %v494 = vsel %vm317, %v240, 0.0
        %v495 = vsel %vm318, %v241, 0.0
        %v496 = vsel %vm319, %v242, 0.0
        %v497 = vsel %vm320, %v243, 0.0
        %v498 = vsel %vm321, %v244, 0.0
        %v499 = vsel %vm247, %v491, 0.0
        %v500 = vsel %vm247, %v493, 0.0
        %v501 = vadd.f32 %v499, %v500
        %v502 = vsel %vm247, %v495, 0.0
        %v503 = vadd.f32 %v501, %v502
        %v504 = vsel %vm247, %v497, 0.0
        %v505 = vadd.f32 %v503, %v504
        %v506 = vsel %vm247, %v492, 0.0
        %v507 = vsel %vm247, %v494, 0.0
        %v508 = vadd.f32 %v506, %v507
        %v509 = vsel %vm247, %v496, 0.0
        %v510 = vadd.f32 %v508, %v509
        %v511 = vsel %vm247, %v498, 0.0
        %v512 = vadd.f32 %v510, %v511
        %vm513 = vcmp.ne.s32.totalorder %v245, 255
        %vm514 = vcmp.ne.s32.totalorder %v246, 255
        %v515 = vsel %vm513, 1, 0
        %v516 = vsel %vm514, 1, 0
        %v517 = vcvt.s32.f32 %v515
        %v518 = vcvt.s32.f32 %v516
        %v519 = vadd.f32 %v254, %v311
        %v520 = vadd.f32 %v261, %v313
        %v521 = vsub.f32 %v519, %v505
        %v522 = vsub.f32 %v520, %v512
        %v523 = vmul.f32 %v517, %v521
        %v524 = vmul.f32 %v518, %v522
        %v525 = vld [vmem:[#allocation5] sm:$0x1]
        %v526 = vsel %vm247, %v523, 0.0
        %v527 = vsel %vm247, %v524, 0.0
        %v528 = vadd.f32 %v526, %v527
        %v529 = vrot.slane %v528, 4
        %v530 = vadd.f32 %v528, %v529
        %v531 = vrot.slane %v530, 2
        %v532 = vadd.f32 %v530, %v531
        %v533 = vrot.slane %v532, 1
        %v534 = vadd.f32 %v532, %v533
        %v535 = vadd.f32 %v525, %v534
        %vm536 = vcmask 122880
        %537 = vst.msk [vmem:[#allocation5] sm:$0x1] %vm536, %v535
        %v538 = vld [vmem:[#allocation6] sm:$0x1]
        %v539 = vsel %vm247, %v517, 0.0
        %v540 = vsel %vm247, %v518, 0.0
        %v541 = vadd.f32 %v539, %v540
        %v542 = vrot.slane %v541, 4
        %v543 = vadd.f32 %v541, %v542
        %v544 = vrot.slane %v543, 2
        %v545 = vadd.f32 %v543, %v544
        %v546 = vrot.slane %v545, 1
        %v547 = vadd.f32 %v545, %v546
        %v548 = vadd.f32 %v538, %v547
        %549 = vst.msk [vmem:[#allocation6] sm:$0x1] %vm536, %v548
        // Predicated region
        $region41: #{tpu_custom_call.1} parent=27 // pred_check
          %p550 = pneg %p226
        $region42: #{tpu_custom_call.1} parent=27 // pred_check_branch
          %552 = sbr.rel (%p550) target = $region44
        $region43: #{tpu_custom_call.1} parent=27 // pred_region
          %v553 = vld [vmem:[#allocation2] sm:$0xf]
          %554 = vst.msk [vmem:[%s225] sm:$0xf] %vm395, %v553
          %v555 = vld [vmem:[#allocation3] sm:$0xf]
          %556 = vst.msk [vmem:[%s225 + $0x4] sm:$0xf] %vm395, %v555
          %v557 = vld [vmem:[#allocation4] sm:$0xf]
          %558 = vst.msk [vmem:[%s225 + $0x8] sm:$0xf] %vm395, %v557
          %v559 = vld [vmem:[#allocation5] sm:$0x1]
          %560 = vst.msk [vmem:[%s225 + $0xc] sm:$0x1] %vm536, %v559
          %v561 = vld [vmem:[#allocation6] sm:$0x1]
          %562 = vst.msk [vmem:[%s225 + $0xd] sm:$0x1] %vm536, %v561
        $region44: #{tpu_custom_call.1} parent=27 // pred_fallthru
          _
        %p563 = scmp.lt.s32.totalorder %s23, 1
        %s564 = scalar_select %p563, %s23, 1
        %s565 = smul.addr %s564, 2
        %s566 = smul.addr %s565, 8
        %s567 = scalar_lea.vmem %s2, %s566
        // Predicated region
        $region45: #{tpu_custom_call.1} parent=27 // pred_check
          %p568 = pneg %p105
        $region46: #{tpu_custom_call.1} parent=27 // pred_check_branch
          %570 = sbr.rel (%p568) target = $region48
        $region47: #{tpu_custom_call.1} parent=27 // pred_region
          _
        $region48: #{tpu_custom_call.1} parent=27 // pred_fallthru
          _
      $region28: #{tpu_custom_call.1} parent=5 // pred_fallthru
        _
      %p571 = scmp.le.s32.totalorder 2, %s14
      // Predicated region
      $region49: #{tpu_custom_call.1} parent=5 // pred_check
        %p572 = pneg %p571
      $region50: #{tpu_custom_call.1} parent=5 // pred_check_branch
        %574 = sbr.rel (%p572) target = $region52
      $region51: #{tpu_custom_call.1} parent=5 // pred_region
        %s575 = ssub.s32 %s14, 2
        // Predicated region
        $region53: #{tpu_custom_call.1} parent=51 // pred_check
          %p576 = pneg %p111
        $region54: #{tpu_custom_call.1} parent=51 // pred_check_branch
          %578 = sbr.rel (%p576) target = $region56
        $region55: #{tpu_custom_call.1} parent=51 // pred_region
          %p579 = scmp.lt.s32.totalorder %s25, 1
          %s580 = scalar_select %p579, %s25, 1
          %s581 = smul.addr %s580, 2
          %s582 = smul.addr %s581, 8
          %s583 = scalar_lea.vmem %s2, %s582
        $region56: #{tpu_custom_call.1} parent=51 // pred_fallthru
          _
      $region52: #{tpu_custom_call.1} parent=5 // pred_fallthru
        _
    $region6: #{tpu_custom_call.1} parent=1 // loop_footer
      %s18 = sadd.s32 1, %s14
    $region7: #{tpu_custom_call.1} parent=1 // loop_footer_branch
      %13 = sbr.rel target = $region3
    $region8: #{tpu_custom_call.1} parent=1 // loop_exit
      _
    %584 = vsyncpa [#allocation8], 1
    %s585 = scalar_lea.sflag [#allocation8], 1
    %586 = vsyncpa %s585, 1
    %587 = vsyncpa [#allocation10], 1
    %s588 = scalar_lea.sflag [#allocation10], 1
    %589 = vsyncpa %s588, 1

</llo_original>
